<compile_context>
chip_gen: v7x
topology: tpu7x:2x2x1
jax: 0.10.0
libtpu: 0.0.40
codegen_flags: <defaults>
</compile_context>

<pallas_src>
from functools import partial

import jax
import jax.numpy as jnp
import numpy as np
from jax import lax
from jax.experimental import pallas as pl
from jax.experimental.pallas import tpu as pltpu


# ---------------------------------------------------------------------------
# Fused decoder-step kernel (single invocation, everything VMEM-resident)
# ---------------------------------------------------------------------------
def decoder_gru_kernel(
        ids_ref, emb_ref, enc_ref, h0_ref, h0rep_ref,          # data
        wah_ref, wae_ref, ba_ref, va_ref,                      # attention
        wie_ref, wic_ref, whh_ref, bih_ref, bhh_ref,           # GRU (gate-fused along N)
        wl_ref, bl_ref,                                         # output Linear (fused, V lane-padded)
        out_ref, logits_ref):
    f32 = jnp.float32
    B, Dh = h0_ref.shape
    _, S, E2 = enc_ref.shape
    Vp, _E = emb_ref.shape

    def mm(x, w_ref):
        # cast activation to the weight dtype (no-op for f32, bf16 MXU path otherwise),
        # accumulate in f32
        return jnp.dot(x.astype(w_ref.dtype), w_ref[...], preferred_element_type=f32)

    # ---- embedding lookup: one-hot @ lane-padded table (Dropout = identity at inference)
    ids = ids_ref[...]                                              # (B, 1) int32
    onehot = (lax.broadcasted_iota(jnp.int32, (B, Vp), 1) == ids)   # (B, Vp)
    emb = mm(onehot.astype(f32), emb_ref)                           # (B, E) f32
    # TODO(synk): at realistic vocab sizes replace the one-hot with a scalar-prefetch
    # row-gather DMA so the embedding table can stay in HBM (esp. v7x, 64 MiB VMEM).

    # ---- additive attention over the S encoder steps -------------------------------
    enc = enc_ref[...]                                              # (B, S, 2Eh) f32
    enc_flat = enc.reshape(B * S, E2)                               # tile-aligned collapse (S % 8 == 0)
    pre = mm(enc_flat, wae_ref) + mm(h0rep_ref[...], wah_ref) + ba_ref[...]   # (B*S, Dh)
    scores = jnp.sum(jnp.tanh(pre) * va_ref[...], axis=-1, keepdims=True)     # (B*S, 1)
    scores = scores.reshape(B, S, 1)                                # (B, S, 1)
    m = jnp.max(scores, axis=1, keepdims=True)                      # softmax over S
    e = jnp.exp(scores - m)
    attn = e / jnp.sum(e, axis=1, keepdims=True)                    # (B, S, 1)
    ctx = jnp.sum(attn * enc, axis=1)                               # (B, 2Eh)  == torch.bmm(a, enc)

    # ---- one GRU step, PyTorch gate order [r | z | n] fused along the N axis -------
    h0 = h0_ref[...]                                                # (B, Dh) f32
    gi = mm(emb, wie_ref) + mm(ctx, wic_ref) + bih_ref[...]         # (B, 3Dh)
    gh = mm(h0, whh_ref) + bhh_ref[...]                             # (B, 3Dh)
    r = jax.nn.sigmoid(gi[:, 0:Dh] + gh[:, 0:Dh])
    z = jax.nn.sigmoid(gi[:, Dh:2 * Dh] + gh[:, Dh:2 * Dh])
    n = jnp.tanh(gi[:, 2 * Dh:3 * Dh] + r * gh[:, 2 * Dh:3 * Dh])
    h_new = (1.0 - z) * n + z * h0                                  # (B, Dh)

    # ---- output Linear(cat(output, W, embedded)) as ONE matmul ----------------------
    lin_in = jnp.concatenate([h_new, ctx, emb], axis=-1)            # (B, Dh+2Eh+E) — one vreg span
    logits = mm(lin_in, wl_ref) + bl_ref[...]                       # (B, Vp) lane-dense

    out_ref[0] = h_new                                              # single h_new store
    logits_ref[0] = logits


# ---------------------------------------------------------------------------
# One-time parameter preprocessing (hoisted out of the per-step call)
# ---------------------------------------------------------------------------
def prepare_params(params, compute_dtype=jnp.float32):
    """Transpose / gate-fuse / lane-pad the PyTorch-layout parameters once.

    compute_dtype: weight dtype fed to the MXU. Use jnp.bfloat16 on v6e/v7x for
    native-rate matmuls; elementwise math stays f32 inside the kernel.
    """
    f32 = jnp.float32
    V, E = params["emb"].shape
    Dh = params["whh"].shape[1]
    E2 = params["wa"].shape[1] - Dh
    Vp = ((V + 127) // 128) * 128                   # lane-dense vocab dimension

    wa = params["wa"].astype(f32)
    wih = params["wih"].astype(f32)
    whh = params["whh"].astype(f32)

    emb_pad = jnp.zeros((Vp, E), f32).at[:V].set(params["emb"].astype(f32))
    wl_t = jnp.zeros((Dh + E2 + E, Vp), f32).at[:, :V].set(params["wl"].astype(f32).T)
    bl = jnp.zeros((1, Vp), f32).at[0, :V].set(params["bl"].astype(f32))

    cd = compute_dtype
    return dict(
        emb=emb_pad.astype(cd),                     # (Vp, E)
        wah=wa[:, :Dh].T.astype(cd),                # (Dh, Dh)   attention hidden proj
        wae=wa[:, Dh:].T.astype(cd),                # (2Eh, Dh)  attention encoder proj
        ba=params["ba"].astype(f32)[None, :],       # (1, Dh)
        va=params["va"].astype(f32),                # (1, Dh)    scoring vector
        wie=wih[:, :E].T.astype(cd),                # (E,   3Dh) gates fused along N
        wic=wih[:, E:].T.astype(cd),                # (2Eh, 3Dh)
        whh=whh.T.astype(cd),                       # (Dh,  3Dh)
        bih=params["bih"].astype(f32)[None, :],     # (1, 3Dh)
        bhh=params["bhh"].astype(f32)[None, :],     # (1, 3Dh)
        wl=wl_t.astype(cd),                         # (Dh+2Eh+E, Vp)
        bl=bl,                                      # (1, Vp)
    )


# ---------------------------------------------------------------------------
# Per-step wrapper (jitted; reused across decode steps)
# ---------------------------------------------------------------------------
@partial(jax.jit, static_argnames=("vocab_size",))
def decoder_gru_step(inp, hidden_state, encoder_outputs, prepped, *, vocab_size):
    S, B, _E2 = encoder_outputs.shape
    Dh = hidden_state.shape[2]
    Vp = prepped["wl"].shape[1]
    f32 = jnp.float32

    ids = inp.reshape(B, 1).astype(jnp.int32)
    enc_b = jnp.transpose(encoder_outputs, (1, 0, 2)).astype(f32)   # (B, S, 2Eh)
    h0 = hidden_state[0].astype(f32)                                # (B, Dh)
    h0_rep = jnp.repeat(h0, S, axis=0)                              # (B*S, Dh), row b*S+s -> h0[b]

    args = (ids, prepped["emb"], enc_b, h0, h0_rep,
            prepped["wah"], prepped["wae"], prepped["ba"], prepped["va"],
            prepped["wie"], prepped["wic"], prepped["whh"],
            prepped["bih"], prepped["bhh"],
            prepped["wl"], prepped["bl"])

    vmem = pltpu.MemorySpace.VMEM
    out_shapes = (jax.ShapeDtypeStruct((1, B, Dh), f32),            # output == new hidden
                  jax.ShapeDtypeStruct((1, B, Vp), f32))            # lane-padded logits

    output, logits_pad = pl.pallas_call(
        decoder_gru_kernel,
        out_shape=out_shapes,
        in_specs=[pl.BlockSpec(memory_space=vmem)] * len(args),
        out_specs=tuple(pl.BlockSpec(memory_space=vmem) for _ in out_shapes),
    )(*args)

    logits = logits_pad[:, :, :vocab_size]                          # (1, B, V) raw logits ("softmax")
    # single-layer GRU: hidden_state is identical to output -> alias, no second store
    return output, logits, output


# ---------------------------------------------------------------------------
# Deterministic PyTorch-shaped parameter init
# ---------------------------------------------------------------------------
def init_params(key, V, E, Eh, Dh):
    k = 1.0 / np.sqrt(Dh)
    specs = [
        ("emb", (V, E)),
        ("wa", (Dh, Dh + 2 * Eh)), ("ba", (Dh,)), ("va", (1, Dh)),
        ("wih", (3 * Dh, E + 2 * Eh)), ("whh", (3 * Dh, Dh)),
        ("bih", (3 * Dh,)), ("bhh", (3 * Dh,)),
        ("wl", (V, Dh + 2 * Eh + E)), ("bl", (V,)),
    ]
    keys = jax.random.split(key, len(specs))
    return {name: jax.random.uniform(kk, shape, jnp.float32, -k, k)
            for (name, shape), kk in zip(specs, keys)}


# ---------------------------------------------------------------------------
# Pure-JAX reference mirroring the PyTorch DecoderGRU.forward semantics
# ---------------------------------------------------------------------------
def decoder_gru_reference(inp, hidden_state, encoder_outputs, p):
    S, B, E2 = encoder_outputs.shape
    Dh = hidden_state.shape[2]
    hp = lax.Precision.HIGHEST

    emb = p["emb"][inp]                                            # (1, B, E)
    hid_rep = jnp.broadcast_to(hidden_state, (S, B, Dh))           # hidden.repeat(S, 1, 1)
    cat = jnp.concatenate([hid_rep, encoder_outputs], axis=2)
    attn_h = jnp.tanh(jnp.einsum('sbi,oi->sbo', cat, p["wa"], precision=hp) + p["ba"])
    scores = jnp.einsum('sbo,ko->sbk', attn_h, p["va"], precision=hp)[..., 0]   # (S, B)
    a = jax.nn.softmax(scores.T, axis=1)                           # (B, S)
    enc_perm = jnp.transpose(encoder_outputs, (1, 0, 2))           # (B, S, 2Eh)
    W = jnp.einsum('bs,bse->be', a, enc_perm, precision=hp)[None]  # (1, B, 2Eh)
    rnn_in = jnp.concatenate([emb, W], axis=2)[0]                  # (B, E+2Eh)
    h = hidden_state[0]
    gx = jnp.einsum('bi,oi->bo', rnn_in, p["wih"], precision=hp) + p["bih"]
    gh = jnp.einsum('bi,oi->bo', h, p["whh"], precision=hp) + p["bhh"]
    r = jax.nn.sigmoid(gx[:, :Dh] + gh[:, :Dh])
    z = jax.nn.sigmoid(gx[:, Dh:2 * Dh] + gh[:, Dh:2 * Dh])
    n = jnp.tanh(gx[:, 2 * Dh:] + r * gh[:, 2 * Dh:])
    h_new = (1.0 - z) * n + z * h
    output = h_new[None]
    lin_in = jnp.concatenate([output, W, emb], axis=2)
    logits = jnp.einsum('sbi,oi->sbo', lin_in, p["wl"], precision=hp) + p["bl"]
    return output, logits, h_new[None]


if __name__ == "__main__":
    # Small shapes consistent with the module: decoder consumes one token per step.
    S, B = 8, 2                      # encoder seq length, batch
    E, Eh, Dh, V = 16, 32, 32, 50    # embedding, encoder hidden, decoder hidden, dict size

    key = jax.random.PRNGKey(0)
    k_inp, k_h, k_enc, k_p = jax.random.split(key, 4)
    inp = jax.random.randint(k_inp, (1, B), 0, V)                          # token ids (seq_len=1)
    hidden0 = 0.5 * jax.random.normal(k_h, (1, B, Dh), jnp.float32)
    enc_out = jax.random.normal(k_enc, (S, B, 2 * Eh), jnp.float32)
    params = init_params(k_p, V, E, Eh, Dh)

    # One-time weight preprocessing; reused across autoregressive decode steps.
    # (Use compute_dtype=jnp.bfloat16 on v6e/v7x for native-rate MXU matmuls.)
    prepped = prepare_params(params, compute_dtype=jnp.float32)

    output, logits, hidden = decoder_gru_step(inp, hidden0, enc_out, prepped, vocab_size=V)
    output = jax.block_until_ready(output)
    logits = jax.block_until_ready(logits)
    hidden = jax.block_until_ready(hidden)

    assert output.shape == (1, B, Dh)
    assert logits.shape == (1, B, V)
    assert hidden.shape == (1, B, Dh)

    ref_out, ref_logits, ref_hid = decoder_gru_reference(inp, hidden0, enc_out, params)
    np.testing.assert_allclose(np.asarray(output), np.asarray(ref_out), rtol=2e-3, atol=2e-3)
    np.testing.assert_allclose(np.asarray(logits), np.asarray(ref_logits), rtol=2e-3, atol=2e-3)
    np.testing.assert_allclose(np.asarray(hidden), np.asarray(ref_hid), rtol=2e-3, atol=2e-3)

    print("KERNEL_OK")
</pallas_src>

<mosaic_0001>
module attributes {stable_mosaic.version = 11 : i64} {
  func.func @decoder_gru_kernel(%arg0: memref<2x1xi32, #tpu.memory_space<vmem>>, %arg1: memref<128x16xf32, #tpu.memory_space<vmem>>, %arg2: memref<2x8x64xf32, #tpu.memory_space<vmem>>, %arg3: memref<2x32xf32, #tpu.memory_space<vmem>>, %arg4: memref<16x32xf32, #tpu.memory_space<vmem>>, %arg5: memref<32x32xf32, #tpu.memory_space<vmem>>, %arg6: memref<64x32xf32, #tpu.memory_space<vmem>>, %arg7: memref<1x32xf32, #tpu.memory_space<vmem>>, %arg8: memref<1x32xf32, #tpu.memory_space<vmem>>, %arg9: memref<16x96xf32, #tpu.memory_space<vmem>>, %arg10: memref<64x96xf32, #tpu.memory_space<vmem>>, %arg11: memref<32x96xf32, #tpu.memory_space<vmem>>, %arg12: memref<1x96xf32, #tpu.memory_space<vmem>>, %arg13: memref<1x96xf32, #tpu.memory_space<vmem>>, %arg14: memref<112x128xf32, #tpu.memory_space<vmem>>, %arg15: memref<1x128xf32, #tpu.memory_space<vmem>>, %arg16: memref<1x2x32xf32, #tpu.memory_space<vmem>>, %arg17: memref<1x2x128xf32, #tpu.memory_space<vmem>>) attributes {dimension_semantics = [], scalar_prefetch = 0 : i64, scratch_operands = 0 : i64, tpu.core_type = #tpu.core_type<tc>} {
    %c0 = arith.constant 0 : index
    %c0_0 = arith.constant 0 : index
    %0 = vector.load %arg0[%c0, %c0_0] : memref<2x1xi32, #tpu.memory_space<vmem>>, vector<2x1xi32>
    %1 = tpu.iota {dimensions = array<i32: 1>} : vector<2x128xi32>
    %2 = vector.broadcast %0 : vector<2x1xi32> to vector<2x128xi32>
    %3 = arith.cmpi eq, %1, %2 : vector<2x128xi32>
    %4 = arith.extui %3 : vector<2x128xi1> to vector<2x128xi32>
    %5 = arith.sitofp %4 : vector<2x128xi32> to vector<2x128xf32>
    %c0_1 = arith.constant 0 : index
    %c0_2 = arith.constant 0 : index
    %6 = vector.load %arg1[%c0_1, %c0_2] : memref<128x16xf32, #tpu.memory_space<vmem>>, vector<128x16xf32>
    %cst = arith.constant dense<0.000000e+00> : vector<2x16xf32>
    %7 = tpu.matmul %5, %6, %cst {dimension_numbers = #tpu.dot_dimension_numbers<[1], [0], [0], [1], [0, 0, 1, 1], [], []>} : vector<2x128xf32>, vector<128x16xf32>, vector<2x16xf32> -> vector<2x16xf32>
    %c0_3 = arith.constant 0 : index
    %c0_4 = arith.constant 0 : index
    %c0_5 = arith.constant 0 : index
    %8 = vector.load %arg2[%c0_3, %c0_4, %c0_5] : memref<2x8x64xf32, #tpu.memory_space<vmem>>, vector<2x8x64xf32>
    %9 = vector.shape_cast %8 : vector<2x8x64xf32> to vector<16x64xf32>
    %c0_6 = arith.constant 0 : index
    %c0_7 = arith.constant 0 : index
    %10 = vector.load %arg6[%c0_6, %c0_7] : memref<64x32xf32, #tpu.memory_space<vmem>>, vector<64x32xf32>
    %cst_8 = arith.constant dense<0.000000e+00> : vector<16x32xf32>
    %11 = tpu.matmul %9, %10, %cst_8 {dimension_numbers = #tpu.dot_dimension_numbers<[1], [0], [0], [1], [0, 0, 1, 1], [], []>} : vector<16x64xf32>, vector<64x32xf32>, vector<16x32xf32> -> vector<16x32xf32>
    %c0_9 = arith.constant 0 : index
    %c0_10 = arith.constant 0 : index
    %12 = vector.load %arg4[%c0_9, %c0_10] : memref<16x32xf32, #tpu.memory_space<vmem>>, vector<16x32xf32>
    %c0_11 = arith.constant 0 : index
    %c0_12 = arith.constant 0 : index
    %13 = vector.load %arg5[%c0_11, %c0_12] : memref<32x32xf32, #tpu.memory_space<vmem>>, vector<32x32xf32>
    %cst_13 = arith.constant dense<0.000000e+00> : vector<16x32xf32>
    %14 = tpu.matmul %12, %13, %cst_13 {dimension_numbers = #tpu.dot_dimension_numbers<[1], [0], [0], [1], [0, 0, 1, 1], [], []>} : vector<16x32xf32>, vector<32x32xf32>, vector<16x32xf32> -> vector<16x32xf32>
    %15 = arith.addf %11, %14 : vector<16x32xf32>
    %c0_14 = arith.constant 0 : index
    %c0_15 = arith.constant 0 : index
    %16 = vector.load %arg7[%c0_14, %c0_15] : memref<1x32xf32, #tpu.memory_space<vmem>>, vector<1x32xf32>
    %17 = vector.broadcast %16 : vector<1x32xf32> to vector<16x32xf32>
    %18 = arith.addf %15, %17 : vector<16x32xf32>
    %19 = math.tanh %18 : vector<16x32xf32>
    %c0_16 = arith.constant 0 : index
    %c0_17 = arith.constant 0 : index
    %20 = vector.load %arg8[%c0_16, %c0_17] : memref<1x32xf32, #tpu.memory_space<vmem>>, vector<1x32xf32>
    %21 = vector.broadcast %20 : vector<1x32xf32> to vector<16x32xf32>
    %22 = arith.mulf %19, %21 : vector<16x32xf32>
    %cst_18 = arith.constant dense<0.000000e+00> : vector<16xf32>
    %23 = vector.multi_reduction <add>, %22, %cst_18 [1] : vector<16x32xf32> to vector<16xf32>
    %24 = vector.shape_cast %23 : vector<16xf32> to vector<16x1xf32>
    %25 = vector.shape_cast %24 : vector<16x1xf32> to vector<2x8x1xf32>
    %cst_19 = arith.constant dense<0xFF800000> : vector<2x1xf32>
    %26 = vector.multi_reduction <maximumf>, %25, %cst_19 [1] : vector<2x8x1xf32> to vector<2x1xf32>
    %27 = vector.shape_cast %26 : vector<2x1xf32> to vector<2x1x1xf32>
    %28 = vector.broadcast %27 : vector<2x1x1xf32> to vector<2x8x1xf32>
    %29 = arith.subf %25, %28 : vector<2x8x1xf32>
    %30 = math.exp %29 : vector<2x8x1xf32>
    %cst_20 = arith.constant dense<0.000000e+00> : vector<2x1xf32>
    %31 = vector.multi_reduction <add>, %30, %cst_20 [1] : vector<2x8x1xf32> to vector<2x1xf32>
    %32 = vector.shape_cast %31 : vector<2x1xf32> to vector<2x1x1xf32>
    %33 = vector.broadcast %32 : vector<2x1x1xf32> to vector<2x8x1xf32>
    %34 = arith.divf %30, %33 : vector<2x8x1xf32>
    %35 = vector.broadcast %34 : vector<2x8x1xf32> to vector<2x8x64xf32>
    %36 = arith.mulf %35, %8 : vector<2x8x64xf32>
    %cst_21 = arith.constant dense<0.000000e+00> : vector<2x64xf32>
    %37 = vector.multi_reduction <add>, %36, %cst_21 [1] : vector<2x8x64xf32> to vector<2x64xf32>
    %c0_22 = arith.constant 0 : index
    %c0_23 = arith.constant 0 : index
    %38 = vector.load %arg3[%c0_22, %c0_23] : memref<2x32xf32, #tpu.memory_space<vmem>>, vector<2x32xf32>
    %c0_24 = arith.constant 0 : index
    %c0_25 = arith.constant 0 : index
    %39 = vector.load %arg9[%c0_24, %c0_25] : memref<16x96xf32, #tpu.memory_space<vmem>>, vector<16x96xf32>
    %cst_26 = arith.constant dense<0.000000e+00> : vector<2x96xf32>
    %40 = tpu.matmul %7, %39, %cst_26 {dimension_numbers = #tpu.dot_dimension_numbers<[1], [0], [0], [1], [0, 0, 1, 1], [], []>} : vector<2x16xf32>, vector<16x96xf32>, vector<2x96xf32> -> vector<2x96xf32>
    %c0_27 = arith.constant 0 : index
    %c0_28 = arith.constant 0 : index
    %41 = vector.load %arg10[%c0_27, %c0_28] : memref<64x96xf32, #tpu.memory_space<vmem>>, vector<64x96xf32>
    %cst_29 = arith.constant dense<0.000000e+00> : vector<2x96xf32>
    %42 = tpu.matmul %37, %41, %cst_29 {dimension_numbers = #tpu.dot_dimension_numbers<[1], [0], [0], [1], [0, 0, 1, 1], [], []>} : vector<2x64xf32>, vector<64x96xf32>, vector<2x96xf32> -> vector<2x96xf32>
    %43 = arith.addf %40, %42 : vector<2x96xf32>
    %c0_30 = arith.constant 0 : index
    %c0_31 = arith.constant 0 : index
    %44 = vector.load %arg12[%c0_30, %c0_31] : memref<1x96xf32, #tpu.memory_space<vmem>>, vector<1x96xf32>
    %45 = vector.broadcast %44 : vector<1x96xf32> to vector<2x96xf32>
    %46 = arith.addf %43, %45 : vector<2x96xf32>
    %c0_32 = arith.constant 0 : index
    %c0_33 = arith.constant 0 : index
    %47 = vector.load %arg11[%c0_32, %c0_33] : memref<32x96xf32, #tpu.memory_space<vmem>>, vector<32x96xf32>
    %cst_34 = arith.constant dense<0.000000e+00> : vector<2x96xf32>
    %48 = tpu.matmul %38, %47, %cst_34 {dimension_numbers = #tpu.dot_dimension_numbers<[1], [0], [0], [1], [0, 0, 1, 1], [], []>} : vector<2x32xf32>, vector<32x96xf32>, vector<2x96xf32> -> vector<2x96xf32>
    %c0_35 = arith.constant 0 : index
    %c0_36 = arith.constant 0 : index
    %49 = vector.load %arg13[%c0_35, %c0_36] : memref<1x96xf32, #tpu.memory_space<vmem>>, vector<1x96xf32>
    %50 = vector.broadcast %49 : vector<1x96xf32> to vector<2x96xf32>
    %51 = arith.addf %48, %50 : vector<2x96xf32>
    %52 = vector.extract_strided_slice %46 {offsets = [0, 0], sizes = [2, 32], strides = [1, 1]} : vector<2x96xf32> to vector<2x32xf32>
    %53 = vector.extract_strided_slice %51 {offsets = [0, 0], sizes = [2, 32], strides = [1, 1]} : vector<2x96xf32> to vector<2x32xf32>
    %54 = arith.addf %52, %53 : vector<2x32xf32>
    %55 = arith.negf %54 : vector<2x32xf32>
    %56 = math.exp %55 : vector<2x32xf32>
    %cst_37 = arith.constant 1.000000e+00 : f32
    %57 = vector.broadcast %cst_37 : f32 to vector<2x32xf32>
    %58 = arith.addf %57, %56 : vector<2x32xf32>
    %59 = arith.divf %57, %58 : vector<2x32xf32>
    %60 = vector.extract_strided_slice %46 {offsets = [0, 32], sizes = [2, 32], strides = [1, 1]} : vector<2x96xf32> to vector<2x32xf32>
    %61 = vector.extract_strided_slice %51 {offsets = [0, 32], sizes = [2, 32], strides = [1, 1]} : vector<2x96xf32> to vector<2x32xf32>
    %62 = arith.addf %60, %61 : vector<2x32xf32>
    %63 = arith.negf %62 : vector<2x32xf32>
    %64 = math.exp %63 : vector<2x32xf32>
    %cst_38 = arith.constant 1.000000e+00 : f32
    %65 = vector.broadcast %cst_38 : f32 to vector<2x32xf32>
    %66 = arith.addf %65, %64 : vector<2x32xf32>
    %67 = arith.divf %65, %66 : vector<2x32xf32>
    %68 = vector.extract_strided_slice %46 {offsets = [0, 64], sizes = [2, 32], strides = [1, 1]} : vector<2x96xf32> to vector<2x32xf32>
    %69 = vector.extract_strided_slice %51 {offsets = [0, 64], sizes = [2, 32], strides = [1, 1]} : vector<2x96xf32> to vector<2x32xf32>
    %70 = arith.mulf %59, %69 : vector<2x32xf32>
    %71 = arith.addf %68, %70 : vector<2x32xf32>
    %72 = math.tanh %71 : vector<2x32xf32>
    %cst_39 = arith.constant 1.000000e+00 : f32
    %73 = vector.broadcast %cst_39 : f32 to vector<2x32xf32>
    %74 = arith.subf %73, %67 : vector<2x32xf32>
    %75 = arith.mulf %74, %72 : vector<2x32xf32>
    %76 = arith.mulf %67, %38 : vector<2x32xf32>
    %77 = arith.addf %75, %76 : vector<2x32xf32>
    %78 = tpu.concatenate %77, %37, %7 in 1 : vector<2x32xf32>, vector<2x64xf32>, vector<2x16xf32> -> vector<2x112xf32>
    %c0_40 = arith.constant 0 : index
    %c0_41 = arith.constant 0 : index
    %79 = vector.load %arg14[%c0_40, %c0_41] : memref<112x128xf32, #tpu.memory_space<vmem>>, vector<112x128xf32>
    %cst_42 = arith.constant dense<0.000000e+00> : vector<2x128xf32>
    %80 = tpu.matmul %78, %79, %cst_42 {dimension_numbers = #tpu.dot_dimension_numbers<[1], [0], [0], [1], [0, 0, 1, 1], [], []>} : vector<2x112xf32>, vector<112x128xf32>, vector<2x128xf32> -> vector<2x128xf32>
    %c0_43 = arith.constant 0 : index
    %c0_44 = arith.constant 0 : index
    %81 = vector.load %arg15[%c0_43, %c0_44] : memref<1x128xf32, #tpu.memory_space<vmem>>, vector<1x128xf32>
    %82 = vector.broadcast %81 : vector<1x128xf32> to vector<2x128xf32>
    %83 = arith.addf %80, %82 : vector<2x128xf32>
    %c0_45 = arith.constant 0 : index
    %c0_46 = arith.constant 0 : index
    %c0_47 = arith.constant 0 : index
    %84 = vector.load %arg16[%c0_45, %c0_46, %c0_47] : memref<1x2x32xf32, #tpu.memory_space<vmem>>, vector<1x2x32xf32>
    %85 = vector.shape_cast %84 : vector<1x2x32xf32> to vector<2x32xf32>
    %86 = vector.shape_cast %77 : vector<2x32xf32> to vector<1x2x32xf32>
    tpu.vector_store %arg16[%c0_45, %c0_46, %c0_47], %86 {strides = array<i32>} : memref<1x2x32xf32, #tpu.memory_space<vmem>>, vector<1x2x32xf32>,
    %c0_48 = arith.constant 0 : index
    %c0_49 = arith.constant 0 : index
    %c0_50 = arith.constant 0 : index
    %87 = vector.load %arg17[%c0_48, %c0_49, %c0_50] : memref<1x2x128xf32, #tpu.memory_space<vmem>>, vector<1x2x128xf32>
    %88 = vector.shape_cast %87 : vector<1x2x128xf32> to vector<2x128xf32>
    %89 = vector.shape_cast %83 : vector<2x128xf32> to vector<1x2x128xf32>
    tpu.vector_store %arg17[%c0_48, %c0_49, %c0_50], %89 {strides = array<i32>} : memref<1x2x128xf32, #tpu.memory_space<vmem>>, vector<1x2x128xf32>,
    return
  }
}

</mosaic_0001>

<llo_original>
// kernel: decoder_gru_step.1
$region0: #{decoder_gru_step.1}
  #allocation0 [shape = 'u32[]', space=smem, size = 0x4, offset = 0x4, fixed_abs, tag = 'smem constant byte address 0x4 - core index']
  #allocation1 [shape = 'u32[144,128]{1,0:T(1,128)}', space=vmem, size = 0x12000, scoped, tag = 'internal scratch']
  %s0 = inlined_call_operand.vmem [shape: s32[2,1], index: 0, kind: input, shape index: {}]
  %s1 = inlined_call_operand.vmem [shape: f32[128,16], index: 1, kind: input, shape index: {}]
  %s2 = inlined_call_operand.vmem [shape: f32[2,8,64], index: 2, kind: input, shape index: {}]
  %s3 = inlined_call_operand.hbm [shape: f32[2,32], index: 3, kind: input, shape index: {}]
  %s4 = inlined_call_operand.vmem [shape: f32[16,32], index: 4, kind: input, shape index: {}]
  %s5 = inlined_call_operand.vmem [shape: f32[32,32], index: 5, kind: input, shape index: {}]
  %s6 = inlined_call_operand.vmem [shape: f32[64,32], index: 6, kind: input, shape index: {}]
  %s7 = inlined_call_operand.vmem [shape: f32[1,32], index: 7, kind: input, shape index: {}]
  %s8 = inlined_call_operand.vmem [shape: f32[1,32], index: 8, kind: input, shape index: {}]
  %s9 = inlined_call_operand.vmem [shape: f32[16,96], index: 9, kind: input, shape index: {}]
  %s10 = inlined_call_operand.vmem [shape: f32[64,96], index: 10, kind: input, shape index: {}]
  %s11 = inlined_call_operand.vmem [shape: f32[32,96], index: 11, kind: input, shape index: {}]
  %s12 = inlined_call_operand.vmem [shape: f32[1,96], index: 12, kind: input, shape index: {}]
  %s13 = inlined_call_operand.vmem [shape: f32[1,96], index: 13, kind: input, shape index: {}]
  %s14 = inlined_call_operand.vmem [shape: f32[112,128], index: 14, kind: input, shape index: {}]
  %s15 = inlined_call_operand.vmem [shape: f32[1,128], index: 15, kind: input, shape index: {}]
  %s16 = inlined_call_operand.vmem [shape: f32[1,2,32], index: 16, kind: output, shape index: {0}]
  %s17 = inlined_call_operand.hbm [shape: f32[1,2,128], index: 17, kind: output, shape index: {1}]
  %18 = xla_tuple %s16, %s17
  %s19 = sld [smem:[#allocation0]]
  $region86: #{decoder_gru_step.1} parent=0
    _
  %s21 = ssub.s32 1, %s19
  %s22 = scalar_select 0, %s21, %s19
  $region1: #{decoder_gru_step.1} parent=0
    #allocation2 [shape = 'u8[1024]{0}', space=vmem, size = 0x400, scoped, tag = 'input window, operand 3, single buffered']
    #allocation3 [shape = 's32[1]{0}', space=sflag, size = 0x4, scoped, tag = 'scoped memory for decoder_gru_step.1']
    #allocation4 [shape = 's32[1]{0}', space=sflag, size = 0x4, scoped, tag = 'scoped memory for decoder_gru_step.1']
    #allocation5 [shape = 'u8[1024]{0}', space=vmem, size = 0x400, scoped, tag = 'output window, operand 1, single buffered']
    %23 = vsyncpa [#allocation3], 0
    %24 = vsyncpa [#allocation4], 0
    // Predicated region
    $region2: #{decoder_gru_step.1} parent=1 // pred_check
      _
    $region3: #{decoder_gru_step.1} parent=1 // pred_check_branch
      %26 = sbr.rel (0) target = $region5
    $region4: #{decoder_gru_step.1} parent=1 // pred_region
      _
    $region5: #{decoder_gru_step.1} parent=1 // pred_fallthru
      _
    // Predicated region
    $region6: #{decoder_gru_step.1} parent=1 // pred_check
      _
    $region7: #{decoder_gru_step.1} parent=1 // pred_check_branch
      %28 = sbr.rel (0) target = $region9
    $region8: #{decoder_gru_step.1} parent=1 // pred_region
      _
    $region9: #{decoder_gru_step.1} parent=1 // pred_fallthru
      _
    // Predicated region
    $region10: #{decoder_gru_step.1} parent=1 // pred_check
      _
    $region11: #{decoder_gru_step.1} parent=1 // pred_check_branch
      %30 = sbr.rel (0) target = $region13
    $region12: #{decoder_gru_step.1} parent=1 // pred_region
      _
    $region13: #{decoder_gru_step.1} parent=1 // pred_fallthru
      _
    // Predicated region
    $region14: #{decoder_gru_step.1} parent=1 // pred_check
      _
    $region15: #{decoder_gru_step.1} parent=1 // pred_check_branch
      %32 = sbr.rel (0) target = $region17
    $region16: #{decoder_gru_step.1} parent=1 // pred_region
      %s34 = ssub.s32 32, 32
      %35 = vsyncadd [#allocation3], %s34
      %s37 = sshll.u32 [#allocation2], 4
      %s38 = int_to_ptr.vmem [resolvable:$true] %s37
      %40 = dma.hbm_to_vmem [thread:$0]  %s3, 32, %s38, [#allocation3]
    $region17: #{decoder_gru_step.1} parent=1 // pred_fallthru
      _
    // Predicated region
    $region18: #{decoder_gru_step.1} parent=1 // pred_check
      _
    $region19: #{decoder_gru_step.1} parent=1 // pred_check_branch
      %42 = sbr.rel (0) target = $region21
    $region20: #{decoder_gru_step.1} parent=1 // pred_region
      _
    $region21: #{decoder_gru_step.1} parent=1 // pred_fallthru
      _
    // Predicated region
    $region22: #{decoder_gru_step.1} parent=1 // pred_check
      _
    $region23: #{decoder_gru_step.1} parent=1 // pred_check_branch
      %44 = sbr.rel (0) target = $region25
    $region24: #{decoder_gru_step.1} parent=1 // pred_region
      _
    $region25: #{decoder_gru_step.1} parent=1 // pred_fallthru
      _
    // Predicated region
    $region26: #{decoder_gru_step.1} parent=1 // pred_check
      _
    $region27: #{decoder_gru_step.1} parent=1 // pred_check_branch
      %46 = sbr.rel (0) target = $region29
    $region28: #{decoder_gru_step.1} parent=1 // pred_region
      _
    $region29: #{decoder_gru_step.1} parent=1 // pred_fallthru
      _
    // Predicated region
    $region30: #{decoder_gru_step.1} parent=1 // pred_check
      _
    $region31: #{decoder_gru_step.1} parent=1 // pred_check_branch
      %48 = sbr.rel (0) target = $region33
    $region32: #{decoder_gru_step.1} parent=1 // pred_region
      _
    $region33: #{decoder_gru_step.1} parent=1 // pred_fallthru
      _
    // Predicated region
    $region34: #{decoder_gru_step.1} parent=1 // pred_check
      _
    $region35: #{decoder_gru_step.1} parent=1 // pred_check_branch
      %50 = sbr.rel (0) target = $region37
    $region36: #{decoder_gru_step.1} parent=1 // pred_region
      _
    $region37: #{decoder_gru_step.1} parent=1 // pred_fallthru
      _
    // Predicated region
    $region38: #{decoder_gru_step.1} parent=1 // pred_check
      _
    $region39: #{decoder_gru_step.1} parent=1 // pred_check_branch
      %52 = sbr.rel (0) target = $region41
    $region40: #{decoder_gru_step.1} parent=1 // pred_region
      _
    $region41: #{decoder_gru_step.1} parent=1 // pred_fallthru
      _
    // Predicated region
    $region42: #{decoder_gru_step.1} parent=1 // pred_check
      _
    $region43: #{decoder_gru_step.1} parent=1 // pred_check_branch
      %54 = sbr.rel (0) target = $region45
    $region44: #{decoder_gru_step.1} parent=1 // pred_region
      _
    $region45: #{decoder_gru_step.1} parent=1 // pred_fallthru
      _
    // Predicated region
    $region46: #{decoder_gru_step.1} parent=1 // pred_check
      _
    $region47: #{decoder_gru_step.1} parent=1 // pred_check_branch
      %56 = sbr.rel (0) target = $region49
    $region48: #{decoder_gru_step.1} parent=1 // pred_region
      _
    $region49: #{decoder_gru_step.1} parent=1 // pred_fallthru
      _
    // Predicated region
    $region50: #{decoder_gru_step.1} parent=1 // pred_check
      _
    $region51: #{decoder_gru_step.1} parent=1 // pred_check_branch
      %58 = sbr.rel (0) target = $region53
    $region52: #{decoder_gru_step.1} parent=1 // pred_region
      _
    $region53: #{decoder_gru_step.1} parent=1 // pred_fallthru
      _
    // Predicated region
    $region54: #{decoder_gru_step.1} parent=1 // pred_check
      _
    $region55: #{decoder_gru_step.1} parent=1 // pred_check_branch
      %60 = sbr.rel (0) target = $region57
    $region56: #{decoder_gru_step.1} parent=1 // pred_region
      _
    $region57: #{decoder_gru_step.1} parent=1 // pred_fallthru
      _
    // Predicated region
    $region58: #{decoder_gru_step.1} parent=1 // pred_check
      _
    $region59: #{decoder_gru_step.1} parent=1 // pred_check_branch
      %62 = sbr.rel (0) target = $region61
    $region60: #{decoder_gru_step.1} parent=1 // pred_region
      _
    $region61: #{decoder_gru_step.1} parent=1 // pred_fallthru
      _
    // Predicated region
    $region62: #{decoder_gru_step.1} parent=1 // pred_check
      _
    $region63: #{decoder_gru_step.1} parent=1 // pred_check_branch
      %64 = sbr.rel (0) target = $region65
    $region64: #{decoder_gru_step.1} parent=1 // pred_region
      _
    $region65: #{decoder_gru_step.1} parent=1 // pred_fallthru
      _
    // Predicated region
    $region66: #{decoder_gru_step.1} parent=1 // pred_check
      _
    $region67: #{decoder_gru_step.1} parent=1 // pred_check_branch
      %66 = sbr.rel (0) target = $region69
    $region68: #{decoder_gru_step.1} parent=1 // pred_region
      %67 = dma.done [#allocation3], 32
    $region69: #{decoder_gru_step.1} parent=1 // pred_fallthru
      _
    %v68 = vld [vmem:[%s0] sm:$0x3]
    %v69 = vlaneseq
    %v70 = vand.u32 %v69, 127
    %71 = vset.pattern.permute.xlu0 0
    %72 = vperm.xlu0 %71, %v68
    %v73 = vpop.permute.xlu0 %72
    %vm74 = vcmp.eq.s32.totalorder %v70, %v73
    %v75 = vsel %vm74, 1, 0
    %v76 = vcvt.s32.f32 %v75
    %v77 = vld [vmem:[%s1] sm:$0xff]
    %v78 = vld [vmem:[%s1 + $0x8] sm:$0xff]
    %v79 = vld [vmem:[%s1 + $0x10] sm:$0xff]
    %v80 = vld [vmem:[%s1 + $0x18] sm:$0xff]
    %v81 = vld [vmem:[%s1 + $0x20] sm:$0xff]
    %v82 = vld [vmem:[%s1 + $0x28] sm:$0xff]
    %v83 = vld [vmem:[%s1 + $0x30] sm:$0xff]
    %v84 = vld [vmem:[%s1 + $0x38] sm:$0xff]
    %v85 = vld [vmem:[%s1 + $0x40] sm:$0xff]
    %v86 = vld [vmem:[%s1 + $0x48] sm:$0xff]
    %v87 = vld [vmem:[%s1 + $0x50] sm:$0xff]
    %v88 = vld [vmem:[%s1 + $0x58] sm:$0xff]
    %v89 = vld [vmem:[%s1 + $0x60] sm:$0xff]
    %v90 = vld [vmem:[%s1 + $0x68] sm:$0xff]
    %v91 = vld [vmem:[%s1 + $0x70] sm:$0xff]
    %v92 = vld [vmem:[%s1 + $0x78] sm:$0xff]
    %93 = vmatprep.subr.mxu0 0.0
    %94 = vmatpush1.msra.mxu0 %v77
    %95 = vmatprep.subr.mxu0 0.0
    %96 = vmatpush1.msra.mxu0 %v78
    %97 = vmatprep.subr.mxu0 0.0
    %98 = vmatpush1.msra.mxu0 %v79
    %99 = vmatprep.subr.mxu0 0.0
    %100 = vmatpush1.msra.mxu0 %v80
    %101 = vmatprep.subr.mxu0 0.0
    %102 = vmatpush1.msra.mxu0 %v81
    %103 = vmatprep.subr.mxu0 0.0
    %104 = vmatpush1.msra.mxu0 %v82
    %105 = vmatprep.subr.mxu0 0.0
    %106 = vmatpush1.msra.mxu0 %v83
    %107 = vmatprep.subr.mxu0 0.0
    %108 = vmatpush1.msra.mxu0 %v84
    %109 = vmatprep.subr.mxu0 0.0
    %110 = vmatpush1.msra.mxu0 %v85
    %111 = vmatprep.subr.mxu0 0.0
    %112 = vmatpush1.msra.mxu0 %v86
    %113 = vmatprep.subr.mxu0 0.0
    %114 = vmatpush1.msra.mxu0 %v87
    %115 = vmatprep.subr.mxu0 0.0
    %116 = vmatpush1.msra.mxu0 %v88
    %117 = vmatprep.subr.mxu0 0.0
    %118 = vmatpush1.msra.mxu0 %v89
    %119 = vmatprep.subr.mxu0 0.0
    %120 = vmatpush1.msra.mxu0 %v90
    %121 = vmatprep.subr.mxu0 0.0
    %122 = vmatpush1.msra.mxu0 %v91
    %123 = vmatprep.subr.mxu0 0.0
    %124 = vmatpush1.msra.mxu0 %v92
    %125 = vmatprep.subr.mxu0 0.0
    %126 = vmatpush1.msra.mxu0 0.0
    %127 = vmatprep.subr.mxu0 0.0
    %128 = vmatpush1.msra.mxu0 0.0
    %129 = vmatprep.subr.mxu0 0.0
    %130 = vmatpush1.msra.mxu0 0.0
    %131 = vmatprep.subr.mxu0 0.0
    %132 = vmatpush1.msra.mxu0 0.0
    %133 = vmatprep.subr.mxu0 0.0
    %134 = vmatpush1.msra.mxu0 0.0
    %135 = vmatprep.subr.mxu0 0.0
    %136 = vmatpush1.msra.mxu0 0.0
    %137 = vmatprep.subr.mxu0 0.0
    %138 = vmatpush1.msra.mxu0 0.0
    %139 = vmatprep.subr.mxu0 0.0
    %140 = vmatpush1.msra.mxu0 0.0
    %141 = vmatprep.subr.mxu0 0.0
    %142 = vmatpush1.msra.mxu0 0.0
    %143 = vmatprep.subr.mxu0 0.0
    %144 = vmatpush1.msra.mxu0 0.0
    %145 = vmatprep.subr.mxu0 0.0
    %146 = vmatpush1.msra.mxu0 0.0
    %147 = vmatprep.subr.mxu0 0.0
    %148 = vmatpush1.msra.mxu0 0.0
    %149 = vmatprep.subr.mxu0 0.0
    %150 = vmatpush1.msra.mxu0 0.0
    %151 = vmatprep.subr.mxu0 0.0
    %152 = vmatpush1.msra.mxu0 0.0
    %153 = vmatprep.subr.mxu0 0.0
    %154 = vmatpush1.msra.mxu0 0.0
    %155 = vmatprep.subr.mxu0 0.0
    %156 = vmatpush1.msra.mxu0 0.0
    %157 = vmatprep.mubr.f32.mxu0 0.0
    %158 = vmatmul.mubr.f32.gmra.mrb[0].mxu0 %v76
    %v159 = vpop.f32.mrb[0].mxu0
    %v160 = vadd.f32 0.0, %v159
    %v161 = vpop.f32.mrb[0].mxu0
    %162 = vdwg.mxu0
    %v163 = vld [vmem:[%s2] sm:$0xff]
    %v164 = vld [vmem:[%s2 + $0x8] sm:$0xff]
    %v165 = vld [vmem:[%s6] sm:$0xff]
    %v166 = vld [vmem:[%s6 + $0x8] sm:$0xff]
    %v167 = vld [vmem:[%s6 + $0x10] sm:$0xff]
    %v168 = vld [vmem:[%s6 + $0x18] sm:$0xff]
    %v169 = vld [vmem:[%s6 + $0x20] sm:$0xff]
    %v170 = vld [vmem:[%s6 + $0x28] sm:$0xff]
    %v171 = vld [vmem:[%s6 + $0x30] sm:$0xff]
    %v172 = vld [vmem:[%s6 + $0x38] sm:$0xff]
    %v173 = vld [vmem:[%s4] sm:$0xff]
    %v174 = vld [vmem:[%s4 + $0x8] sm:$0xff]
    %v175 = vld [vmem:[%s5] sm:$0xff]
    %v176 = vld [vmem:[%s5 + $0x8] sm:$0xff]
    %v177 = vld [vmem:[%s5 + $0x10] sm:$0xff]
    %v178 = vld [vmem:[%s5 + $0x18] sm:$0xff]
    %vm179 = vcmask 261120
    %v181 = vsel %vm179, %v173, 0
    %v184 = vsel %vm179, %v174, 0
    %186 = vmatprep.subr.mxu0 0.0
    %187 = vmatpush1.msra.mxu0 %v175
    %188 = vmatprep.subr.mxu0 0.0
    %189 = vmatpush1.msra.mxu0 %v176
    %190 = vmatprep.subr.mxu0 0.0
    %191 = vmatpush1.msra.mxu0 %v177
    %192 = vmatprep.subr.mxu0 0.0
    %193 = vmatpush1.msra.mxu0 %v178
    %194 = vmatprep.subr.mxu0 0.0
    %195 = vmatpush1.msra.mxu0 0.0
    %196 = vmatprep.subr.mxu0 0.0
    %197 = vmatpush1.msra.mxu0 0.0
    %198 = vmatprep.subr.mxu0 0.0
    %199 = vmatpush1.msra.mxu0 0.0
    %200 = vmatprep.subr.mxu0 0.0
    %201 = vmatpush1.msra.mxu0 0.0
    %202 = vmatprep.subr.mxu0 0.0
    %203 = vmatpush1.msra.mxu0 0.0
    %204 = vmatprep.subr.mxu0 0.0
    %205 = vmatpush1.msra.mxu0 0.0
    %206 = vmatprep.subr.mxu0 0.0
    %207 = vmatpush1.msra.mxu0 0.0
    %208 = vmatprep.subr.mxu0 0.0
    %209 = vmatpush1.msra.mxu0 0.0
    %210 = vmatprep.subr.mxu0 0.0
    %211 = vmatpush1.msra.mxu0 0.0
    %212 = vmatprep.subr.mxu0 0.0
    %213 = vmatpush1.msra.mxu0 0.0
    %214 = vmatprep.subr.mxu0 0.0
    %215 = vmatpush1.msra.mxu0 0.0
    %216 = vmatprep.subr.mxu0 0.0
    %217 = vmatpush1.msra.mxu0 0.0
    %218 = vmatprep.subr.mxu0 0.0
    %219 = vmatpush1.msra.mxu0 0.0
    %220 = vmatprep.subr.mxu0 0.0
    %221 = vmatpush1.msra.mxu0 0.0
    %222 = vmatprep.subr.mxu0 0.0
    %223 = vmatpush1.msra.mxu0 0.0
    %224 = vmatprep.subr.mxu0 0.0
    %225 = vmatpush1.msra.mxu0 0.0
    %226 = vmatprep.subr.mxu0 0.0
    %227 = vmatpush1.msra.mxu0 0.0
    %228 = vmatprep.subr.mxu0 0.0
    %229 = vmatpush1.msra.mxu0 0.0
    %230 = vmatprep.subr.mxu0 0.0
    %231 = vmatpush1.msra.mxu0 0.0
    %232 = vmatprep.subr.mxu0 0.0
    %233 = vmatpush1.msra.mxu0 0.0
    %234 = vmatprep.subr.mxu0 0.0
    %235 = vmatpush1.msra.mxu0 0.0
    %236 = vmatprep.subr.mxu0 0.0
    %237 = vmatpush1.msra.mxu0 0.0
    %238 = vmatprep.subr.mxu0 0.0
    %239 = vmatpush1.msra.mxu0 0.0
    %240 = vmatprep.subr.mxu0 0.0
    %241 = vmatpush1.msra.mxu0 0.0
    %242 = vmatprep.subr.mxu0 0.0
    %243 = vmatpush1.msra.mxu0 0.0
    %244 = vmatprep.subr.mxu0 0.0
    %245 = vmatpush1.msra.mxu0 0.0
    %246 = vmatprep.subr.mxu0 0.0
    %247 = vmatpush1.msra.mxu0 0.0
    %248 = vmatprep.subr.mxu0 0.0
    %249 = vmatpush1.msra.mxu0 0.0
    %250 = vmatprep.mubr.f32.mxu0 0.0
    %251 = vmatmul.mubr.f32.gmra.mrb[0].mxu0 %v181
    %v252 = vpop.f32.mrb[0].mxu0
    %v253 = vadd.f32 0.0, %v252
    %v254 = vpop.f32.mrb[0].mxu0
    %255 = vmatprep.mubr.f32.mxu0 0.0
    %256 = vmatmul.mubr.f32.gmra.mrb[0].mxu0 %v184
    %v257 = vpop.f32.mrb[0].mxu0
    %v258 = vadd.f32 0.0, %v257
    %v259 = vpop.f32.mrb[0].mxu0
    %260 = vdwg.mxu0
    %vm261 = vcmask 523264
    %v263 = vsel %vm261, %v163, 0
    %v266 = vsel %vm261, %v164, 0
    %268 = vmatprep.subr.mxu0 0.0
    %269 = vmatpush1.msra.mxu0 %v165
    %270 = vmatprep.subr.mxu0 0.0
    %271 = vmatpush1.msra.mxu0 %v166
    %272 = vmatprep.subr.mxu0 0.0
    %273 = vmatpush1.msra.mxu0 %v167
    %274 = vmatprep.subr.mxu0 0.0
    %275 = vmatpush1.msra.mxu0 %v168
    %276 = vmatprep.subr.mxu0 0.0
    %277 = vmatpush1.msra.mxu0 %v169
    %278 = vmatprep.subr.mxu0 0.0
    %279 = vmatpush1.msra.mxu0 %v170
    %280 = vmatprep.subr.mxu0 0.0
    %281 = vmatpush1.msra.mxu0 %v171
    %282 = vmatprep.subr.mxu0 0.0
    %283 = vmatpush1.msra.mxu0 %v172
    %284 = vmatprep.subr.mxu0 0.0
    %285 = vmatpush1.msra.mxu0 0.0
    %286 = vmatprep.subr.mxu0 0.0
    %287 = vmatpush1.msra.mxu0 0.0
    %288 = vmatprep.subr.mxu0 0.0
    %289 = vmatpush1.msra.mxu0 0.0
    %290 = vmatprep.subr.mxu0 0.0
    %291 = vmatpush1.msra.mxu0 0.0
    %292 = vmatprep.subr.mxu0 0.0
    %293 = vmatpush1.msra.mxu0 0.0
    %294 = vmatprep.subr.mxu0 0.0
    %295 = vmatpush1.msra.mxu0 0.0
    %296 = vmatprep.subr.mxu0 0.0
    %297 = vmatpush1.msra.mxu0 0.0
    %298 = vmatprep.subr.mxu0 0.0
    %299 = vmatpush1.msra.mxu0 0.0
    %300 = vmatprep.subr.mxu0 0.0
    %301 = vmatpush1.msra.mxu0 0.0
    %302 = vmatprep.subr.mxu0 0.0
    %303 = vmatpush1.msra.mxu0 0.0
    %304 = vmatprep.subr.mxu0 0.0
    %305 = vmatpush1.msra.mxu0 0.0
    %306 = vmatprep.subr.mxu0 0.0
    %307 = vmatpush1.msra.mxu0 0.0
    %308 = vmatprep.subr.mxu0 0.0
    %309 = vmatpush1.msra.mxu0 0.0
    %310 = vmatprep.subr.mxu0 0.0
    %311 = vmatpush1.msra.mxu0 0.0
    %312 = vmatprep.subr.mxu0 0.0
    %313 = vmatpush1.msra.mxu0 0.0
    %314 = vmatprep.subr.mxu0 0.0
    %315 = vmatpush1.msra.mxu0 0.0
    %316 = vmatprep.subr.mxu0 0.0
    %317 = vmatpush1.msra.mxu0 0.0
    %318 = vmatprep.subr.mxu0 0.0
    %319 = vmatpush1.msra.mxu0 0.0
    %320 = vmatprep.subr.mxu0 0.0
    %321 = vmatpush1.msra.mxu0 0.0
    %322 = vmatprep.subr.mxu0 0.0
    %323 = vmatpush1.msra.mxu0 0.0
    %324 = vmatprep.subr.mxu0 0.0
    %325 = vmatpush1.msra.mxu0 0.0
    %326 = vmatprep.subr.mxu0 0.0
    %327 = vmatpush1.msra.mxu0 0.0
    %328 = vmatprep.subr.mxu0 0.0
    %329 = vmatpush1.msra.mxu0 0.0
    %330 = vmatprep.subr.mxu0 0.0
    %331 = vmatpush1.msra.mxu0 0.0
    %332 = vmatprep.mubr.f32.mxu0 0.0
    %333 = vmatmul.mubr.f32.gmra.mrb[0].mxu0 %v263
    %v334 = vpop.f32.mrb[0].mxu0
    %v335 = vadd.f32 %v253, %v334
    %v336 = vpop.f32.mrb[0].mxu0
    %337 = vmatprep.mubr.f32.mxu0 0.0
    %338 = vmatmul.mubr.f32.gmra.mrb[0].mxu0 %v266
    %v339 = vpop.f32.mrb[0].mxu0
    %v340 = vadd.f32 %v258, %v339
    %v341 = vpop.f32.mrb[0].mxu0
    %342 = vdwg.mxu0
    %v343 = vld [vmem:[%s7] sm:$0x1]
    %v345 = vlaneseq
    %v346 = vshrl.u32 %v345, 7
    %v347 = vsub.s32 0, %v346
    %v348 = vrot.slane %v343, %v347
    %v350 = vadd.f32 %v335, %v348
    %v351 = vadd.f32 %v340, %v348
    %v352 = vtanh.pop %v350
    %v353 = vtanh.pop %v351
    %v354 = vld [vmem:[%s8] sm:$0x1]
    %v356 = vlaneseq
    %v357 = vshrl.u32 %v356, 7
    %v358 = vsub.s32 0, %v357
    %v359 = vrot.slane %v354, %v358
    %v361 = vmul.f32 %v352, %v359
    %v362 = vmul.f32 %v353, %v359
    %v363 = vsel %vm179, %v361, 0.0
    %364 = vadd.xlane.f32.xlu0 %v363
    %v365 = vpop.xlane.xlu0 %364
    %v366 = vsel %vm179, %v362, 0.0
    %367 = vadd.xlane.f32.xlu0 %v366
    %v368 = vpop.xlane.xlu0 %367
    %v369 = vrot.slane %v365, 4
    %v370 = vmax.f32 %v365, %v369
    %v371 = vrot.slane %v370, 2
    %v372 = vmax.f32 %v370, %v371
    %v373 = vrot.slane %v372, 1
    %v374 = vmax.f32 %v372, %v373
    %v375 = vrot.slane %v368, 4
    %v376 = vmax.f32 %v368, %v375
    %v377 = vrot.slane %v376, 2
    %v378 = vmax.f32 %v376, %v377
    %v379 = vrot.slane %v378, 1
    %v380 = vmax.f32 %v378, %v379
    %v381 = vsub.f32 %v365, %v374
    %v382 = vsub.f32 %v368, %v380
    %v383 = vmul.f32 %v381, 1.442695
    %v384 = vpow.pop %v383
    %v385 = vmul.f32 %v382, 1.442695
    %v386 = vpow.pop %v385
    %v387 = vrot.slane %v384, 4
    %v388 = vadd.f32 %v384, %v387
    %v389 = vrot.slane %v388, 2
    %v390 = vadd.f32 %v388, %v389
    %v391 = vrot.slane %v390, 1
    %v392 = vadd.f32 %v390, %v391
    %v393 = vrot.slane %v386, 4
    %v394 = vadd.f32 %v386, %v393
    %v395 = vrot.slane %v394, 2
    %v396 = vadd.f32 %v394, %v395
    %v397 = vrot.slane %v396, 1
    %v398 = vadd.f32 %v396, %v397
    %v399 = vrcp.pop %v392
    %v400 = vmul.f32 %v384, %v399
    %v401 = vrcp.pop %v398
    %v402 = vmul.f32 %v386, %v401
    %v403 = vmul.f32 %v400, %v163
    %v404 = vmul.f32 %v402, %v164
    %v405 = vsel %vm261, %v403, 0.0
    %v406 = vrot.slane %v405, 4
    %v407 = vadd.f32 %v405, %v406
    %v408 = vrot.slane %v407, 2
    %v409 = vadd.f32 %v407, %v408
    %v410 = vrot.slane %v409, 1
    %v411 = vadd.f32 %v409, %v410
    %v412 = vsel %vm261, %v404, 0.0
    %v413 = vrot.slane %v412, 4
    %v414 = vadd.f32 %v412, %v413
    %v415 = vrot.slane %v414, 2
    %v416 = vadd.f32 %v414, %v415
    %v417 = vrot.slane %v416, 1
    %v418 = vadd.f32 %v416, %v417
    %v419 = vld [vmem:[#allocation2] sm:$0x3]
    %v420 = vld [vmem:[%s9] sm:$0xff]
    %v421 = vld [vmem:[%s9 + $0x8] sm:$0xff]
    %v422 = vld [vmem:[%s10] sm:$0xff]
    %v423 = vld [vmem:[%s10 + $0x8] sm:$0xff]
    %v424 = vld [vmem:[%s10 + $0x10] sm:$0xff]
    %v425 = vld [vmem:[%s10 + $0x18] sm:$0xff]
    %v426 = vld [vmem:[%s10 + $0x20] sm:$0xff]
    %v427 = vld [vmem:[%s10 + $0x28] sm:$0xff]
    %v428 = vld [vmem:[%s10 + $0x30] sm:$0xff]
    %v429 = vld [vmem:[%s10 + $0x38] sm:$0xff]
    %vm432 = vcmask 1041409
    %v433 = vsel %vm432, %v418, %v411
    %v434 = vsel %vm261, %v433, 0
    %436 = vmatprep.subr.mxu0 0.0
    %437 = vmatpush1.msra.mxu0 %v422
    %438 = vmatprep.subr.mxu0 0.0
    %439 = vmatpush1.msra.mxu0 %v423
    %440 = vmatprep.subr.mxu0 0.0
    %441 = vmatpush1.msra.mxu0 %v424
    %442 = vmatprep.subr.mxu0 0.0
    %443 = vmatpush1.msra.mxu0 %v425
    %444 = vmatprep.subr.mxu0 0.0
    %445 = vmatpush1.msra.mxu0 %v426
    %446 = vmatprep.subr.mxu0 0.0
    %447 = vmatpush1.msra.mxu0 %v427
    %448 = vmatprep.subr.mxu0 0.0
    %449 = vmatpush1.msra.mxu0 %v428
    %450 = vmatprep.subr.mxu0 0.0
    %451 = vmatpush1.msra.mxu0 %v429
    %452 = vmatprep.subr.mxu0 0.0
    %453 = vmatpush1.msra.mxu0 0.0
    %454 = vmatprep.subr.mxu0 0.0
    %455 = vmatpush1.msra.mxu0 0.0
    %456 = vmatprep.subr.mxu0 0.0
    %457 = vmatpush1.msra.mxu0 0.0
    %458 = vmatprep.subr.mxu0 0.0
    %459 = vmatpush1.msra.mxu0 0.0
    %460 = vmatprep.subr.mxu0 0.0
    %461 = vmatpush1.msra.mxu0 0.0
    %462 = vmatprep.subr.mxu0 0.0
    %463 = vmatpush1.msra.mxu0 0.0
    %464 = vmatprep.subr.mxu0 0.0
    %465 = vmatpush1.msra.mxu0 0.0
    %466 = vmatprep.subr.mxu0 0.0
    %467 = vmatpush1.msra.mxu0 0.0
    %468 = vmatprep.subr.mxu0 0.0
    %469 = vmatpush1.msra.mxu0 0.0
    %470 = vmatprep.subr.mxu0 0.0
    %471 = vmatpush1.msra.mxu0 0.0
    %472 = vmatprep.subr.mxu0 0.0
    %473 = vmatpush1.msra.mxu0 0.0
    %474 = vmatprep.subr.mxu0 0.0
    %475 = vmatpush1.msra.mxu0 0.0
    %476 = vmatprep.subr.mxu0 0.0
    %477 = vmatpush1.msra.mxu0 0.0
    %478 = vmatprep.subr.mxu0 0.0
    %479 = vmatpush1.msra.mxu0 0.0
    %480 = vmatprep.subr.mxu0 0.0
    %481 = vmatpush1.msra.mxu0 0.0
    %482 = vmatprep.subr.mxu0 0.0
    %483 = vmatpush1.msra.mxu0 0.0
    %484 = vmatprep.subr.mxu0 0.0
    %485 = vmatpush1.msra.mxu0 0.0
    %486 = vmatprep.subr.mxu0 0.0
    %487 = vmatpush1.msra.mxu0 0.0
    %488 = vmatprep.subr.mxu0 0.0
    %489 = vmatpush1.msra.mxu0 0.0
    %490 = vmatprep.subr.mxu0 0.0
    %491 = vmatpush1.msra.mxu0 0.0
    %492 = vmatprep.subr.mxu0 0.0
    %493 = vmatpush1.msra.mxu0 0.0
    %494 = vmatprep.subr.mxu0 0.0
    %495 = vmatpush1.msra.mxu0 0.0
    %496 = vmatprep.subr.mxu0 0.0
    %497 = vmatpush1.msra.mxu0 0.0
    %498 = vmatprep.subr.mxu0 0.0
    %499 = vmatpush1.msra.mxu0 0.0
    %500 = vmatprep.mubr.f32.mxu0 0.0
    %501 = vmatmul.mubr.f32.gmra.mrb[0].mxu0 %v434
    %v502 = vpop.f32.mrb[0].mxu0
    %v503 = vadd.f32 0.0, %v502
    %v504 = vpop.f32.mrb[0].mxu0
    %505 = vdwg.mxu0
    %vm506 = vcmask 130048
    %v508 = vsel %vm506, %v160, 0
    %510 = vmatprep.subr.mxu0 0.0
    %511 = vmatpush1.msra.mxu0 %v420
    %512 = vmatprep.subr.mxu0 0.0
    %513 = vmatpush1.msra.mxu0 %v421
    %514 = vmatprep.subr.mxu0 0.0
    %515 = vmatpush1.msra.mxu0 0.0
    %516 = vmatprep.subr.mxu0 0.0
    %517 = vmatpush1.msra.mxu0 0.0
    %518 = vmatprep.subr.mxu0 0.0
    %519 = vmatpush1.msra.mxu0 0.0
    %520 = vmatprep.subr.mxu0 0.0
    %521 = vmatpush1.msra.mxu0 0.0
    %522 = vmatprep.subr.mxu0 0.0
    %523 = vmatpush1.msra.mxu0 0.0
    %524 = vmatprep.subr.mxu0 0.0
    %525 = vmatpush1.msra.mxu0 0.0
    %526 = vmatprep.subr.mxu0 0.0
    %527 = vmatpush1.msra.mxu0 0.0
    %528 = vmatprep.subr.mxu0 0.0
    %529 = vmatpush1.msra.mxu0 0.0
    %530 = vmatprep.subr.mxu0 0.0
    %531 = vmatpush1.msra.mxu0 0.0
    %532 = vmatprep.subr.mxu0 0.0
    %533 = vmatpush1.msra.mxu0 0.0
    %534 = vmatprep.subr.mxu0 0.0
    %535 = vmatpush1.msra.mxu0 0.0
    %536 = vmatprep.subr.mxu0 0.0
    %537 = vmatpush1.msra.mxu0 0.0
    %538 = vmatprep.subr.mxu0 0.0
    %539 = vmatpush1.msra.mxu0 0.0
    %540 = vmatprep.subr.mxu0 0.0
    %541 = vmatpush1.msra.mxu0 0.0
    %542 = vmatprep.subr.mxu0 0.0
    %543 = vmatpush1.msra.mxu0 0.0
    %544 = vmatprep.subr.mxu0 0.0
    %545 = vmatpush1.msra.mxu0 0.0
    %546 = vmatprep.subr.mxu0 0.0
    %547 = vmatpush1.msra.mxu0 0.0
    %548 = vmatprep.subr.mxu0 0.0
    %549 = vmatpush1.msra.mxu0 0.0
    %550 = vmatprep.subr.mxu0 0.0
    %551 = vmatpush1.msra.mxu0 0.0
    %552 = vmatprep.subr.mxu0 0.0
    %553 = vmatpush1.msra.mxu0 0.0
    %554 = vmatprep.subr.mxu0 0.0
    %555 = vmatpush1.msra.mxu0 0.0
    %556 = vmatprep.subr.mxu0 0.0
    %557 = vmatpush1.msra.mxu0 0.0
    %558 = vmatprep.subr.mxu0 0.0
    %559 = vmatpush1.msra.mxu0 0.0
    %560 = vmatprep.subr.mxu0 0.0
    %561 = vmatpush1.msra.mxu0 0.0
    %562 = vmatprep.subr.mxu0 0.0
    %563 = vmatpush1.msra.mxu0 0.0
    %564 = vmatprep.subr.mxu0 0.0
    %565 = vmatpush1.msra.mxu0 0.0
    %566 = vmatprep.subr.mxu0 0.0
    %567 = vmatpush1.msra.mxu0 0.0
    %568 = vmatprep.subr.mxu0 0.0
    %569 = vmatpush1.msra.mxu0 0.0
    %570 = vmatprep.subr.mxu0 0.0
    %571 = vmatpush1.msra.mxu0 0.0
    %572 = vmatprep.subr.mxu0 0.0
    %573 = vmatpush1.msra.mxu0 0.0
    %574 = vmatprep.mubr.f32.mxu0 0.0
    %575 = vmatmul.mubr.f32.gmra.mrb[0].mxu0 %v508
    %v576 = vpop.f32.mrb[0].mxu0
    %v577 = vadd.f32 %v503, %v576
    %v578 = vpop.f32.mrb[0].mxu0
    %579 = vdwg.mxu0
    %v580 = vld [vmem:[%s12] sm:$0x1]
    %v582 = vlaneseq
    %v583 = vshrl.u32 %v582, 7
    %v584 = vsub.s32 0, %v583
    %v585 = vrot.slane %v580, %v584
    %v587 = vadd.f32 %v577, %v585
    %v588 = vld [vmem:[%s11] sm:$0xff]
    %v589 = vld [vmem:[%s11 + $0x8] sm:$0xff]
    %v590 = vld [vmem:[%s11 + $0x10] sm:$0xff]
    %v591 = vld [vmem:[%s11 + $0x18] sm:$0xff]
    %v592 = vld [vmem:[%s13] sm:$0x1]
    %v594 = vlaneseq
    %v595 = vshrl.u32 %v594, 7
    %v596 = vsub.s32 0, %v595
    %v597 = vrot.slane %v592, %v596
    %v600 = vsel %vm179, %v419, 0
    %602 = vmatprep.subr.mxu0 0.0
    %603 = vmatpush1.msra.mxu0 %v588
    %604 = vmatprep.subr.mxu0 0.0
    %605 = vmatpush1.msra.mxu0 %v589
    %606 = vmatprep.subr.mxu0 0.0
    %607 = vmatpush1.msra.mxu0 %v590
    %608 = vmatprep.subr.mxu0 0.0
    %609 = vmatpush1.msra.mxu0 %v591
    %610 = vmatprep.subr.mxu0 0.0
    %611 = vmatpush1.msra.mxu0 0.0
    %612 = vmatprep.subr.mxu0 0.0
    %613 = vmatpush1.msra.mxu0 0.0
    %614 = vmatprep.subr.mxu0 0.0
    %615 = vmatpush1.msra.mxu0 0.0
    %616 = vmatprep.subr.mxu0 0.0
    %617 = vmatpush1.msra.mxu0 0.0
    %618 = vmatprep.subr.mxu0 0.0
    %619 = vmatpush1.msra.mxu0 0.0
    %620 = vmatprep.subr.mxu0 0.0
    %621 = vmatpush1.msra.mxu0 0.0
    %622 = vmatprep.subr.mxu0 0.0
    %623 = vmatpush1.msra.mxu0 0.0
    %624 = vmatprep.subr.mxu0 0.0
    %625 = vmatpush1.msra.mxu0 0.0
    %626 = vmatprep.subr.mxu0 0.0
    %627 = vmatpush1.msra.mxu0 0.0
    %628 = vmatprep.subr.mxu0 0.0
    %629 = vmatpush1.msra.mxu0 0.0
    %630 = vmatprep.subr.mxu0 0.0
    %631 = vmatpush1.msra.mxu0 0.0
    %632 = vmatprep.subr.mxu0 0.0
    %633 = vmatpush1.msra.mxu0 0.0
    %634 = vmatprep.subr.mxu0 0.0
    %635 = vmatpush1.msra.mxu0 0.0
    %636 = vmatprep.subr.mxu0 0.0
    %637 = vmatpush1.msra.mxu0 0.0
    %638 = vmatprep.subr.mxu0 0.0
    %639 = vmatpush1.msra.mxu0 0.0
    %640 = vmatprep.subr.mxu0 0.0
    %641 = vmatpush1.msra.mxu0 0.0
    %642 = vmatprep.subr.mxu0 0.0
    %643 = vmatpush1.msra.mxu0 0.0
    %644 = vmatprep.subr.mxu0 0.0
    %645 = vmatpush1.msra.mxu0 0.0
    %646 = vmatprep.subr.mxu0 0.0
    %647 = vmatpush1.msra.mxu0 0.0
    %648 = vmatprep.subr.mxu0 0.0
    %649 = vmatpush1.msra.mxu0 0.0
    %650 = vmatprep.subr.mxu0 0.0
    %651 = vmatpush1.msra.mxu0 0.0
    %652 = vmatprep.subr.mxu0 0.0
    %653 = vmatpush1.msra.mxu0 0.0
    %654 = vmatprep.subr.mxu0 0.0
    %655 = vmatpush1.msra.mxu0 0.0
    %656 = vmatprep.subr.mxu0 0.0
    %657 = vmatpush1.msra.mxu0 0.0
    %658 = vmatprep.subr.mxu0 0.0
    %659 = vmatpush1.msra.mxu0 0.0
    %660 = vmatprep.subr.mxu0 0.0
    %661 = vmatpush1.msra.mxu0 0.0
    %662 = vmatprep.subr.mxu0 0.0
    %663 = vmatpush1.msra.mxu0 0.0
    %664 = vmatprep.subr.mxu0 0.0
    %665 = vmatpush1.msra.mxu0 0.0
    %666 = vmatprep.mubr.f32.mxu0 0.0
    %667 = vmatmul.mubr.f32.gmra.mrb[0].mxu0 %v600
    %v668 = vpop.f32.mrb[0].mxu0
    %v669 = vadd.f32 %v597, %v668
    %v670 = vpop.f32.mrb[0].mxu0
    %671 = vdwg.mxu0
    %v672 = vadd.f32 %v587, %v669
    %v673 = vxor.u32 %v672, 2147483648
    %v674 = vmul.f32 %v673, 1.442695
    %v675 = vpow.pop %v674
    %v676 = vadd.f32 %v675, 1.0
    %v677 = vrcp.pop %v676
    %v678 = vmul.f32 1.0, %v677
    %680 = vrot.lane.b32.xlu0 %v669, 64
    %v681 = vpop.permute.xlu0 %680
    %v683 = vmul.f32 %v678, %v681
    %685 = vrot.lane.b32.xlu0 %v683, 64
    %v686 = vpop.permute.xlu0 %685
    %v688 = vadd.f32 %v587, %v686
    %v689 = vtanh.pop %v688
    %v690 = vsub.f32 1.0, %v678
    %692 = vrot.lane.b32.xlu0 %v689, 96
    %v693 = vpop.permute.xlu0 %692
    %v695 = vmul.f32 %v690, %v693
    %696 = vrot.lane.b32.xlu0 %v419, 32
    %v697 = vpop.permute.xlu0 %696
    %v699 = vmul.f32 %v678, %v697
    %v700 = vadd.f32 %v695, %v699
    %702 = vrot.lane.b32.xlu0 %v700, 96
    %v703 = vpop.permute.xlu0 %702
    %705 = vrot.lane.b32.xlu0 %v433, 32
    %v706 = vpop.permute.xlu0 %705
    %708 = vrot.lane.b32.xlu0 %v160, 96
    %v709 = vpop.permute.xlu0 %708
    %v711 = vsel %vm179, %v703, %v706
    %vm712 = vcmask 785408
    %v713 = vsel %vm712, %v711, %v709
    %v714 = vld [vmem:[%s14] sm:$0xff]
    %v715 = vld [vmem:[%s14 + $0x8] sm:$0xff]
    %v716 = vld [vmem:[%s14 + $0x10] sm:$0xff]
    %v717 = vld [vmem:[%s14 + $0x18] sm:$0xff]
    %v718 = vld [vmem:[%s14 + $0x20] sm:$0xff]
    %v719 = vld [vmem:[%s14 + $0x28] sm:$0xff]
    %v720 = vld [vmem:[%s14 + $0x30] sm:$0xff]
    %v721 = vld [vmem:[%s14 + $0x38] sm:$0xff]
    %v722 = vld [vmem:[%s14 + $0x40] sm:$0xff]
    %v723 = vld [vmem:[%s14 + $0x48] sm:$0xff]
    %v724 = vld [vmem:[%s14 + $0x50] sm:$0xff]
    %v725 = vld [vmem:[%s14 + $0x58] sm:$0xff]
    %v726 = vld [vmem:[%s14 + $0x60] sm:$0xff]
    %v727 = vld [vmem:[%s14 + $0x68] sm:$0xff]
    %v728 = vld [vmem:[%s15] sm:$0x1]
    %v730 = vlaneseq
    %v731 = vshrl.u32 %v730, 7
    %v732 = vsub.s32 0, %v731
    %v733 = vrot.slane %v728, %v732
    %vm735 = vcmask 916480
    %v737 = vsel %vm735, %v713, 0
    %739 = vmatprep.subr.mxu0 0.0
    %740 = vmatpush1.msra.mxu0 %v714
    %741 = vmatprep.subr.mxu0 0.0
    %742 = vmatpush1.msra.mxu0 %v715
    %743 = vmatprep.subr.mxu0 0.0
    %744 = vmatpush1.msra.mxu0 %v716
    %745 = vmatprep.subr.mxu0 0.0
    %746 = vmatpush1.msra.mxu0 %v717
    %747 = vmatprep.subr.mxu0 0.0
    %748 = vmatpush1.msra.mxu0 %v718
    %749 = vmatprep.subr.mxu0 0.0
    %750 = vmatpush1.msra.mxu0 %v719
    %751 = vmatprep.subr.mxu0 0.0
    %752 = vmatpush1.msra.mxu0 %v720
    %753 = vmatprep.subr.mxu0 0.0
    %754 = vmatpush1.msra.mxu0 %v721
    %755 = vmatprep.subr.mxu0 0.0
    %756 = vmatpush1.msra.mxu0 %v722
    %757 = vmatprep.subr.mxu0 0.0
    %758 = vmatpush1.msra.mxu0 %v723
    %759 = vmatprep.subr.mxu0 0.0
    %760 = vmatpush1.msra.mxu0 %v724
    %761 = vmatprep.subr.mxu0 0.0
    %762 = vmatpush1.msra.mxu0 %v725
    %763 = vmatprep.subr.mxu0 0.0
    %764 = vmatpush1.msra.mxu0 %v726
    %765 = vmatprep.subr.mxu0 0.0
    %766 = vmatpush1.msra.mxu0 %v727
    %767 = vmatprep.subr.mxu0 0.0
    %768 = vmatpush1.msra.mxu0 0.0
    %769 = vmatprep.subr.mxu0 0.0
    %770 = vmatpush1.msra.mxu0 0.0
    %771 = vmatprep.subr.mxu0 0.0
    %772 = vmatpush1.msra.mxu0 0.0
    %773 = vmatprep.subr.mxu0 0.0
    %774 = vmatpush1.msra.mxu0 0.0
    %775 = vmatprep.subr.mxu0 0.0
    %776 = vmatpush1.msra.mxu0 0.0
    %777 = vmatprep.subr.mxu0 0.0
    %778 = vmatpush1.msra.mxu0 0.0
    %779 = vmatprep.subr.mxu0 0.0
    %780 = vmatpush1.msra.mxu0 0.0
    %781 = vmatprep.subr.mxu0 0.0
    %782 = vmatpush1.msra.mxu0 0.0
    %783 = vmatprep.subr.mxu0 0.0
    %784 = vmatpush1.msra.mxu0 0.0
    %785 = vmatprep.subr.mxu0 0.0
    %786 = vmatpush1.msra.mxu0 0.0
    %787 = vmatprep.subr.mxu0 0.0
    %788 = vmatpush1.msra.mxu0 0.0
    %789 = vmatprep.subr.mxu0 0.0
    %790 = vmatpush1.msra.mxu0 0.0
    %791 = vmatprep.subr.mxu0 0.0
    %792 = vmatpush1.msra.mxu0 0.0
    %793 = vmatprep.subr.mxu0 0.0
    %794 = vmatpush1.msra.mxu0 0.0
    %795 = vmatprep.subr.mxu0 0.0
    %796 = vmatpush1.msra.mxu0 0.0
    %797 = vmatprep.subr.mxu0 0.0
    %798 = vmatpush1.msra.mxu0 0.0
    %799 = vmatprep.subr.mxu0 0.0
    %800 = vmatpush1.msra.mxu0 0.0
    %801 = vmatprep.subr.mxu0 0.0
    %802 = vmatpush1.msra.mxu0 0.0
    %803 = vmatprep.mubr.f32.mxu0 0.0
    %804 = vmatmul.mubr.f32.gmra.mrb[0].mxu0 %v737
    %v805 = vpop.f32.mrb[0].mxu0
    %v806 = vadd.f32 %v733, %v805
    %v807 = vpop.f32.mrb[0].mxu0
    %808 = vdwg.mxu0
    %vm809 = vcmask 254976
    %810 = vst.msk [vmem:[%s16] sm:$0x3] %vm809, %v703
    %811 = vst [vmem:[#allocation5] sm:$0x3] %v806
    // Predicated region
    $region70: #{decoder_gru_step.1} parent=1 // pred_check
      _
    $region71: #{decoder_gru_step.1} parent=1 // pred_check_branch
      %813 = sbr.rel (0) target = $region73
    $region72: #{decoder_gru_step.1} parent=1 // pred_region
      _
    $region73: #{decoder_gru_step.1} parent=1 // pred_fallthru
      _
    // Predicated region
    $region74: #{decoder_gru_step.1} parent=1 // pred_check
      _
    $region75: #{decoder_gru_step.1} parent=1 // pred_check_branch
      %815 = sbr.rel (0) target = $region77
    $region76: #{decoder_gru_step.1} parent=1 // pred_region
      %s817 = ssub.s32 32, 32
      %818 = vsyncadd [#allocation4], %s817
      %s820 = sshll.u32 [#allocation5], 4
      %s821 = int_to_ptr.vmem [resolvable:$true] %s820
      %823 = dma.vmem_to_hbm [thread:$0]  %s821, 32, %s17, [#allocation4]
    $region77: #{decoder_gru_step.1} parent=1 // pred_fallthru
      _
    // Predicated region
    $region78: #{decoder_gru_step.1} parent=1 // pred_check
      _
    $region79: #{decoder_gru_step.1} parent=1 // pred_check_branch
      %825 = sbr.rel (0) target = $region81
    $region80: #{decoder_gru_step.1} parent=1 // pred_region
      _
    $region81: #{decoder_gru_step.1} parent=1 // pred_fallthru
      _
    // Predicated region
    $region82: #{decoder_gru_step.1} parent=1 // pred_check
      _
    $region83: #{decoder_gru_step.1} parent=1 // pred_check_branch
      %827 = sbr.rel (0) target = $region85
    $region84: #{decoder_gru_step.1} parent=1 // pred_region
      %828 = dma.done [#allocation4], 32
    $region85: #{decoder_gru_step.1} parent=1 // pred_fallthru
      _
    %829 = vsyncpa [#allocation3], 1
    %830 = vsyncpa [#allocation4], 1

</llo_original>
